<compile_context>
chip_gen: v7x
topology: tpu7x:2x2x1
jax: 0.10.0
libtpu: 0.0.40
codegen_flags: <defaults>
</compile_context>

<pallas_src>
import functools

import jax
import jax.numpy as jnp
from jax import lax
from jax.experimental import pallas as pl
from jax.experimental.pallas import tpu as pltpu


def dyn_encoder_kernel(obs_ref, dyn_ref, w1a_ref, w1b_ref, b1_ref,
                       w2_ref, b2_ref, w3_ref, b3_ref, out_ref,
                       *, action_dim, upscale):
    cdtype = w2_ref.dtype  # matmul-operand dtype (bf16 on v5e/v6e/v7x fast path)

    # Layer 1: concat(obs, dyn) @ W1 expressed as two dots against the
    # resident row-blocks of W1 -> the concatenated x never exists in HBM.
    h1 = (jnp.dot(obs_ref[...], w1a_ref[...], preferred_element_type=jnp.float32)
          + jnp.dot(dyn_ref[...], w1b_ref[...], preferred_element_type=jnp.float32)
          + b1_ref[...])
    h1 = jnp.maximum(h1, 0.0)                              # f32 VPU

    # Layer 2
    h2 = jnp.dot(h1.astype(cdtype), w2_ref[...],
                 preferred_element_type=jnp.float32) + b2_ref[...]
    h2 = jnp.maximum(h2, 0.0)

    # Output layer: one dot over N = 2*A -> [mu | log_std] in a single slab.
    out = jnp.dot(h2.astype(cdtype), w3_ref[...],
                  preferred_element_type=jnp.float32) + b3_ref[...]

    # Epilogue stays f32. Lane-masked select instead of slice-then-concat:
    # lane-dim slices/concat are not views and would force VMEM relayouts.
    # tanh/exp run on all 2A lanes — free, the EUP slot has huge slack here.
    inv_upscale = 1.0 / upscale                            # trace-time constant
    loc_all = upscale * jnp.tanh(out * inv_upscale)        # tanh -> EUP
    scale_all = jnp.exp(jnp.clip(out, -5.0, 2.0))          # exp  -> EUP
    col = lax.broadcasted_iota(jnp.int32, out.shape, 1)
    out_ref[...] = jnp.where(col < action_dim, loc_all, scale_all)
    # NOTE: on a partial final batch tile the padding rows compute garbage
    # (possibly NaN) tanh/exp; those rows are masked out of the writeback,
    # so this is benign — do not "fix" it.

    # TODO(synk): TanhNormal rsample/log_prob (stochastic sampling + tanh
    # log-det) are distribution ops, not part of forward(); not implemented.


def dyn_encoder_forward_slab(obs, dyn, params, *, upscale=1.0,
                             batch_tile=2048, compute_dtype=jnp.bfloat16):
    """Fused MLP forward. Returns the [B, 2*A] slab = [loc | scale]."""
    if upscale <= 0:
        raise ValueError("upscale must be > 0")

    B, OBS = obs.shape
    _, DYN = dyn.shape
    HID = params["w1"].shape[1]
    two_a = params["w3"].shape[1]
    A = two_a // 2

    # Split the pre-fused layer-1 weight back into obs/dyn row blocks so the
    # kernel never needs a concatenated x. Weights/inputs go to the MXU dtype
    # (bf16 halves DMA bytes + hits the native MXU path on v6e/v7x); biases
    # stay f32 (added post-accumulation in the f32 epilogue).
    w1a = params["w1"][:OBS].astype(compute_dtype)
    w1b = params["w1"][OBS:].astype(compute_dtype)
    w2 = params["w2"].astype(compute_dtype)
    w3 = params["w3"].astype(compute_dtype)
    b1, b2, b3 = params["b1"], params["b2"], params["b3"]
    obs_c = obs.astype(compute_dtype)
    dyn_c = dyn.astype(compute_dtype)

    # Large batch tiles: per-grid-step overhead dominates this tiny MLP.
    # Even a (4096, IN) bf16 tile is well under scoped-VMEM limits on every
    # generation (incl. v7x's 64 MiB physical / 32 MiB scoped). When
    # B > batch_tile the "parallel" batch axis gives v7x's second TC work.
    TB = B if B <= batch_tile else batch_tile
    grid = (pl.cdiv(B, TB),)

    def resident(a):
        # Whole-array block with a constant index -> resident in VMEM across
        # all grid steps. (pipeline_mode=pl.Buffered(1) would halve its VMEM
        # footprint; irrelevant at HID=32, revisit if HID grows on v7x.)
        return pl.BlockSpec(a.shape, lambda i: (0,) * a.ndim)

    in_specs = [
        pl.BlockSpec((TB, OBS), lambda i: (i, 0)),   # obs tiled over batch
        pl.BlockSpec((TB, DYN), lambda i: (i, 0)),   # dyn tiled over batch
        resident(w1a), resident(w1b), resident(b1),
        resident(w2), resident(b2),
        resident(w3), resident(b3),
    ]
    out_specs = pl.BlockSpec((TB, two_a), lambda i: (i, 0))

    in_itemsize = jnp.dtype(compute_dtype).itemsize
    flops = 2 * B * ((OBS + DYN) * HID + HID * HID + HID * two_a)
    bytes_accessed = (in_itemsize * (B * (OBS + DYN)
                                     + (OBS + DYN) * HID + HID * HID
                                     + HID * two_a)
                      + 4 * (HID + HID + two_a)      # f32 biases
                      + 4 * B * two_a)               # f32 output slab
    cost = pl.CostEstimate(flops=flops,
                           transcendentals=2 * B * two_a,
                           bytes_accessed=bytes_accessed)

    kernel = functools.partial(dyn_encoder_kernel,
                               action_dim=A, upscale=float(upscale))

    return pl.pallas_call(
        kernel,
        out_shape=jax.ShapeDtypeStruct((B, two_a), jnp.float32),
        grid=grid,
        in_specs=in_specs,
        out_specs=out_specs,
        compiler_params=pltpu.CompilerParams(
            dimension_semantics=("parallel",)),
        cost_estimate=cost,
    )(obs_c, dyn_c, w1a, w1b, b1, w2, b2, w3, b3)


def dyn_encoder_forward(obs, dyn, params, *, upscale=1.0,
                        batch_tile=2048, compute_dtype=jnp.bfloat16):
    """Convenience: returns (loc, scale), each [B, A].

    If the consumer can take the fused [B, 2*A] slab directly, prefer
    `dyn_encoder_forward_slab` and skip this split (each XLA slice is an
    extra HBM round-trip of the slab)."""
    slab = dyn_encoder_forward_slab(obs, dyn, params, upscale=upscale,
                                    batch_tile=batch_tile,
                                    compute_dtype=compute_dtype)
    A = slab.shape[-1] // 2
    return slab[:, :A], slab[:, A:]


def _reference_forward(obs, dyn, params, upscale=1.0):
    x = jnp.concatenate([obs, dyn], axis=-1)
    h1 = jnp.maximum(x @ params["w1"] + params["b1"], 0.0)
    h2 = jnp.maximum(h1 @ params["w2"] + params["b2"], 0.0)
    out = h2 @ params["w3"] + params["b3"]
    mu, log_std = jnp.split(out, 2, axis=-1)
    log_std = jnp.clip(log_std, -5.0, 2.0)
    return upscale * jnp.tanh(mu / upscale), jnp.exp(log_std)


if __name__ == "__main__":
    # Small, forward-consistent shapes.
    B, OBS, DYN, HID, ACT = 2, 16, 8, 32, 4
    UPSCALE = 1.0

    key = jax.random.PRNGKey(0)
    ks = jax.random.split(key, 8)

    def init_w(k, fan_in, fan_out):
        lim = 1.0 / jnp.sqrt(jnp.float32(fan_in))
        return jax.random.uniform(k, (fan_in, fan_out), jnp.float32, -lim, lim)

    def init_b(k, fan_in, fan_out):
        lim = 1.0 / jnp.sqrt(jnp.float32(fan_in))
        return jax.random.uniform(k, (1, fan_out), jnp.float32, -lim, lim)

    obs = jax.random.normal(ks[0], (B, OBS), jnp.float32)
    dyn = jax.random.normal(ks[1], (B, DYN), jnp.float32)

    # Weights stored pre-fused:
    #   w1 : [OBS+DYN, HID]   (obs rows on top, dyn rows below)
    #   w3 : [HID, 2*ACT]     (mu half | log_std half)
    params = {
        "w1": init_w(ks[2], OBS + DYN, HID),
        "b1": init_b(ks[3], OBS + DYN, HID),
        "w2": init_w(ks[4], HID, HID),
        "b2": init_b(ks[5], HID, HID),
        "w3": init_w(ks[6], HID, 2 * ACT),
        "b3": init_b(ks[7], HID, 2 * ACT),
    }

    ref_loc, ref_scale = _reference_forward(obs, dyn, params, upscale=UPSCALE)

    # 1) f32 compute path: bit-for-bit-ish against the f32 reference.
    loc, scale = dyn_encoder_forward(obs, dyn, params, upscale=UPSCALE,
                                     compute_dtype=jnp.float32)
    jax.block_until_ready((loc, scale))
    assert loc.shape == (B, ACT) and scale.shape == (B, ACT)
    assert jnp.allclose(loc, ref_loc, atol=1e-5, rtol=1e-5)
    assert jnp.allclose(scale, ref_scale, atol=1e-5, rtol=1e-5)

    # 2) default bf16 MXU-operand path (production config on v6e/v7x):
    #    looser tolerance vs. the f32 reference.
    loc_bf, scale_bf = dyn_encoder_forward(obs, dyn, params, upscale=UPSCALE,
                                           compute_dtype=jnp.bfloat16)
    jax.block_until_ready((loc_bf, scale_bf))
    assert jnp.allclose(loc_bf, ref_loc, atol=5e-2, rtol=5e-2)
    assert jnp.allclose(scale_bf, ref_scale, atol=5e-2, rtol=5e-2)

    # 3) multi-tile + partial-final-tile path (grid > 1, masked writeback).
    B2 = 300
    obs2 = jax.random.normal(ks[0], (B2, OBS), jnp.float32)
    dyn2 = jax.random.normal(ks[1], (B2, DYN), jnp.float32)
    ref_loc2, ref_scale2 = _reference_forward(obs2, dyn2, params, upscale=UPSCALE)
    loc2, scale2 = dyn_encoder_forward(obs2, dyn2, params, upscale=UPSCALE,
                                       batch_tile=128,
                                       compute_dtype=jnp.float32)
    jax.block_until_ready((loc2, scale2))
    assert jnp.allclose(loc2, ref_loc2, atol=1e-5, rtol=1e-5)
    assert jnp.allclose(scale2, ref_scale2, atol=1e-5, rtol=1e-5)

    print("KERNEL_OK")
</pallas_src>

<mosaic_0001>
module attributes {stable_mosaic.version = 11 : i64} {
  func.func @dyn_encoder_kernel(%arg0: i32, %arg1: memref<2x16xf32, #tpu.memory_space<vmem>>, %arg2: memref<2x8xf32, #tpu.memory_space<vmem>>, %arg3: memref<16x32xf32, #tpu.memory_space<vmem>>, %arg4: memref<8x32xf32, #tpu.memory_space<vmem>>, %arg5: memref<1x32xf32, #tpu.memory_space<vmem>>, %arg6: memref<32x32xf32, #tpu.memory_space<vmem>>, %arg7: memref<1x32xf32, #tpu.memory_space<vmem>>, %arg8: memref<32x8xf32, #tpu.memory_space<vmem>>, %arg9: memref<1x8xf32, #tpu.memory_space<vmem>>, %arg10: memref<2x8xf32, #tpu.memory_space<vmem>>) attributes {dimension_semantics = [#tpu.dimension_semantics<parallel>], iteration_bounds = array<i64: 1>, scalar_prefetch = 0 : i64, scratch_operands = 0 : i64, tpu.core_type = #tpu.core_type<tc>, window_params = [{transform_indices = @transform_0, window_bounds = array<i64: 2, 16>}, {transform_indices = @transform_1, window_bounds = array<i64: 2, 8>}, {pipeline_mode = #tpu.pipeline_mode<synchronous>, transform_indices = @transform_2, window_bounds = array<i64: 16, 32>}, {pipeline_mode = #tpu.pipeline_mode<synchronous>, transform_indices = @transform_3, window_bounds = array<i64: 8, 32>}, {pipeline_mode = #tpu.pipeline_mode<synchronous>, transform_indices = @transform_4, window_bounds = array<i64: 1, 32>}, {pipeline_mode = #tpu.pipeline_mode<synchronous>, transform_indices = @transform_5, window_bounds = array<i64: 32, 32>}, {pipeline_mode = #tpu.pipeline_mode<synchronous>, transform_indices = @transform_6, window_bounds = array<i64: 1, 32>}, {pipeline_mode = #tpu.pipeline_mode<synchronous>, transform_indices = @transform_7, window_bounds = array<i64: 32, 8>}, {pipeline_mode = #tpu.pipeline_mode<synchronous>, transform_indices = @transform_8, window_bounds = array<i64: 1, 8>}, {transform_indices = @transform_9, window_bounds = array<i64: 2, 8>}]} {
    %c0 = arith.constant 0 : index
    %c0_0 = arith.constant 0 : index
    %0 = vector.load %arg1[%c0, %c0_0] : memref<2x16xf32, #tpu.memory_space<vmem>>, vector<2x16xf32>
    %c0_1 = arith.constant 0 : index
    %c0_2 = arith.constant 0 : index
    %1 = vector.load %arg3[%c0_1, %c0_2] : memref<16x32xf32, #tpu.memory_space<vmem>>, vector<16x32xf32>
    %cst = arith.constant dense<0.000000e+00> : vector<2x32xf32>
    %2 = tpu.matmul %0, %1, %cst {dimension_numbers = #tpu.dot_dimension_numbers<[1], [0], [0], [1], [0, 0, 1, 1], [], []>} : vector<2x16xf32>, vector<16x32xf32>, vector<2x32xf32> -> vector<2x32xf32>
    %c0_3 = arith.constant 0 : index
    %c0_4 = arith.constant 0 : index
    %3 = vector.load %arg2[%c0_3, %c0_4] : memref<2x8xf32, #tpu.memory_space<vmem>>, vector<2x8xf32>
    %c0_5 = arith.constant 0 : index
    %c0_6 = arith.constant 0 : index
    %4 = vector.load %arg4[%c0_5, %c0_6] : memref<8x32xf32, #tpu.memory_space<vmem>>, vector<8x32xf32>
    %cst_7 = arith.constant dense<0.000000e+00> : vector<2x32xf32>
    %5 = tpu.matmul %3, %4, %cst_7 {dimension_numbers = #tpu.dot_dimension_numbers<[1], [0], [0], [1], [0, 0, 1, 1], [], []>} : vector<2x8xf32>, vector<8x32xf32>, vector<2x32xf32> -> vector<2x32xf32>
    %6 = arith.addf %2, %5 : vector<2x32xf32>
    %c0_8 = arith.constant 0 : index
    %c0_9 = arith.constant 0 : index
    %7 = vector.load %arg5[%c0_8, %c0_9] : memref<1x32xf32, #tpu.memory_space<vmem>>, vector<1x32xf32>
    %8 = vector.broadcast %7 : vector<1x32xf32> to vector<2x32xf32>
    %9 = arith.addf %6, %8 : vector<2x32xf32>
    %cst_10 = arith.constant 0.000000e+00 : f32
    %10 = vector.broadcast %cst_10 : f32 to vector<2x32xf32>
    %11 = arith.maximumf %9, %10 : vector<2x32xf32>
    %c0_11 = arith.constant 0 : index
    %c0_12 = arith.constant 0 : index
    %12 = vector.load %arg6[%c0_11, %c0_12] : memref<32x32xf32, #tpu.memory_space<vmem>>, vector<32x32xf32>
    %cst_13 = arith.constant dense<0.000000e+00> : vector<2x32xf32>
    %13 = tpu.matmul %11, %12, %cst_13 {dimension_numbers = #tpu.dot_dimension_numbers<[1], [0], [0], [1], [0, 0, 1, 1], [], []>} : vector<2x32xf32>, vector<32x32xf32>, vector<2x32xf32> -> vector<2x32xf32>
    %c0_14 = arith.constant 0 : index
    %c0_15 = arith.constant 0 : index
    %14 = vector.load %arg7[%c0_14, %c0_15] : memref<1x32xf32, #tpu.memory_space<vmem>>, vector<1x32xf32>
    %15 = vector.broadcast %14 : vector<1x32xf32> to vector<2x32xf32>
    %16 = arith.addf %13, %15 : vector<2x32xf32>
    %cst_16 = arith.constant 0.000000e+00 : f32
    %17 = vector.broadcast %cst_16 : f32 to vector<2x32xf32>
    %18 = arith.maximumf %16, %17 : vector<2x32xf32>
    %c0_17 = arith.constant 0 : index
    %c0_18 = arith.constant 0 : index
    %19 = vector.load %arg8[%c0_17, %c0_18] : memref<32x8xf32, #tpu.memory_space<vmem>>, vector<32x8xf32>
    %cst_19 = arith.constant dense<0.000000e+00> : vector<2x8xf32>
    %20 = tpu.matmul %18, %19, %cst_19 {dimension_numbers = #tpu.dot_dimension_numbers<[1], [0], [0], [1], [0, 0, 1, 1], [], []>} : vector<2x32xf32>, vector<32x8xf32>, vector<2x8xf32> -> vector<2x8xf32>
    %c0_20 = arith.constant 0 : index
    %c0_21 = arith.constant 0 : index
    %21 = vector.load %arg9[%c0_20, %c0_21] : memref<1x8xf32, #tpu.memory_space<vmem>>, vector<1x8xf32>
    %22 = vector.broadcast %21 : vector<1x8xf32> to vector<2x8xf32>
    %23 = arith.addf %20, %22 : vector<2x8xf32>
    %cst_22 = arith.constant 1.000000e+00 : f32
    %24 = vector.broadcast %cst_22 : f32 to vector<2x8xf32>
    %25 = arith.mulf %23, %24 : vector<2x8xf32>
    %26 = math.tanh %25 : vector<2x8xf32>
    %cst_23 = arith.constant 1.000000e+00 : f32
    %27 = vector.broadcast %cst_23 : f32 to vector<2x8xf32>
    %28 = arith.mulf %27, %26 : vector<2x8xf32>
    %cst_24 = arith.constant -5.000000e+00 : f32
    %cst_25 = arith.constant 2.000000e+00 : f32
    %29 = vector.broadcast %cst_24 : f32 to vector<2x8xf32>
    %30 = arith.maximumf %29, %23 : vector<2x8xf32>
    %31 = vector.broadcast %cst_25 : f32 to vector<2x8xf32>
    %32 = arith.minimumf %31, %30 : vector<2x8xf32>
    %33 = math.exp %32 : vector<2x8xf32>
    %34 = tpu.iota {dimensions = array<i32: 1>} : vector<2x8xi32>
    %c4_i32 = arith.constant 4 : i32
    %35 = vector.broadcast %c4_i32 : i32 to vector<2x8xi32>
    %36 = arith.cmpi slt, %34, %35 : vector<2x8xi32>
    %37 = arith.select %36, %28, %33 : vector<2x8xi1>, vector<2x8xf32>
    %c0_26 = arith.constant 0 : index
    %c0_27 = arith.constant 0 : index
    %38 = vector.load %arg10[%c0_26, %c0_27] : memref<2x8xf32, #tpu.memory_space<vmem>>, vector<2x8xf32>
    tpu.vector_store %arg10[%c0_26, %c0_27], %37 {strides = array<i32>} : memref<2x8xf32, #tpu.memory_space<vmem>>, vector<2x8xf32>,
    return
  }
  func.func @transform_0(%arg0: i32) -> (i32, i32) {
    %c0_i32 = arith.constant 0 : i32
    %c0_i32_0 = arith.constant 0 : i32
    return %arg0, %c0_i32 : i32, i32
  }
  func.func @transform_1(%arg0: i32) -> (i32, i32) {
    %c0_i32 = arith.constant 0 : i32
    %c0_i32_0 = arith.constant 0 : i32
    return %arg0, %c0_i32 : i32, i32
  }
  func.func @transform_2(%arg0: i32) -> (i32, i32) {
    %c0_i32 = arith.constant 0 : i32
    %c0_i32_0 = arith.constant 0 : i32
    %c0_i32_1 = arith.constant 0 : i32
    return %c0_i32, %c0_i32_0 : i32, i32
  }
  func.func @transform_3(%arg0: i32) -> (i32, i32) {
    %c0_i32 = arith.constant 0 : i32
    %c0_i32_0 = arith.constant 0 : i32
    %c0_i32_1 = arith.constant 0 : i32
    return %c0_i32, %c0_i32_0 : i32, i32
  }
  func.func @transform_4(%arg0: i32) -> (i32, i32) {
    %c0_i32 = arith.constant 0 : i32
    %c0_i32_0 = arith.constant 0 : i32
    %c0_i32_1 = arith.constant 0 : i32
    return %c0_i32, %c0_i32_0 : i32, i32
  }
  func.func @transform_5(%arg0: i32) -> (i32, i32) {
    %c0_i32 = arith.constant 0 : i32
    %c0_i32_0 = arith.constant 0 : i32
    %c0_i32_1 = arith.constant 0 : i32
    return %c0_i32, %c0_i32_0 : i32, i32
  }
  func.func @transform_6(%arg0: i32) -> (i32, i32) {
    %c0_i32 = arith.constant 0 : i32
    %c0_i32_0 = arith.constant 0 : i32
    %c0_i32_1 = arith.constant 0 : i32
    return %c0_i32, %c0_i32_0 : i32, i32
  }
  func.func @transform_7(%arg0: i32) -> (i32, i32) {
    %c0_i32 = arith.constant 0 : i32
    %c0_i32_0 = arith.constant 0 : i32
    %c0_i32_1 = arith.constant 0 : i32
    return %c0_i32, %c0_i32_0 : i32, i32
  }
  func.func @transform_8(%arg0: i32) -> (i32, i32) {
    %c0_i32 = arith.constant 0 : i32
    %c0_i32_0 = arith.constant 0 : i32
    %c0_i32_1 = arith.constant 0 : i32
    return %c0_i32, %c0_i32_0 : i32, i32
  }
  func.func @transform_9(%arg0: i32) -> (i32, i32) {
    %c0_i32 = arith.constant 0 : i32
    %c0_i32_0 = arith.constant 0 : i32
    return %arg0, %c0_i32 : i32, i32
  }
}

</mosaic_0001>

<llo_original>
// kernel: tpu_custom_call.1
$region0: #{tpu_custom_call.1}
  #allocation0 [shape = 'u32[]', space=smem, size = 0x4, offset = 0x4, fixed_abs, tag = 'smem constant byte address 0x4 - core index']
  #allocation1 [shape = 'u32[144,128]{1,0:T(1,128)}', space=vmem, size = 0x12000, scoped, tag = 'internal scratch']
  %s0 = inlined_call_operand.vmem [shape: f32[2,16], index: 0, kind: input, shape index: {}]
  %s1 = inlined_call_operand.vmem [shape: f32[2,8], index: 1, kind: input, shape index: {}]
  %s2 = inlined_call_operand.vmem [shape: f32[16,32], index: 2, kind: input, shape index: {}]
  %s3 = inlined_call_operand.hbm [shape: f32[8,32], index: 3, kind: input, shape index: {}]
  %s4 = inlined_call_operand.vmem [shape: f32[1,32], index: 4, kind: input, shape index: {}]
  %s5 = inlined_call_operand.vmem [shape: f32[32,32], index: 5, kind: input, shape index: {}]
  %s6 = inlined_call_operand.vmem [shape: f32[1,32], index: 6, kind: input, shape index: {}]
  %s7 = inlined_call_operand.vmem [shape: f32[32,8], index: 7, kind: input, shape index: {}]
  %s8 = inlined_call_operand.vmem [shape: f32[1,8], index: 8, kind: input, shape index: {}]
  %s9 = inlined_call_operand.hbm [shape: f32[2,8], index: 9, kind: output, shape index: {}]
  %s10 = sld [smem:[#allocation0]]
  $region50: #{tpu_custom_call.1} parent=0
    _
  %s12 = ssub.s32 1, %s10
  %s13 = scalar_select 0, %s12, %s10
  $region1: #{tpu_custom_call.1} parent=0
    #allocation2 [shape = 'u8[4096]{0}', space=vmem, size = 0x1000, scoped, tag = 'input window, operand 3, single buffered']
    #allocation3 [shape = 's32[1]{0}', space=sflag, size = 0x4, scoped, tag = 'scoped memory for tpu_custom_call.1']
    #allocation4 [shape = 's32[1]{0}', space=sflag, size = 0x4, scoped, tag = 'scoped memory for tpu_custom_call.1']
    #allocation5 [shape = 'u8[1024]{0}', space=vmem, size = 0x400, scoped, tag = 'output window, operand 0, single buffered']
    %14 = vsyncpa [#allocation3], 0
    %15 = vsyncpa [#allocation4], 0
    // Predicated region
    $region2: #{tpu_custom_call.1} parent=1 // pred_check
      _
    $region3: #{tpu_custom_call.1} parent=1 // pred_check_branch
      %17 = sbr.rel (0) target = $region5
    $region4: #{tpu_custom_call.1} parent=1 // pred_region
      _
    $region5: #{tpu_custom_call.1} parent=1 // pred_fallthru
      _
    // Predicated region
    $region6: #{tpu_custom_call.1} parent=1 // pred_check
      _
    $region7: #{tpu_custom_call.1} parent=1 // pred_check_branch
      %19 = sbr.rel (0) target = $region9
    $region8: #{tpu_custom_call.1} parent=1 // pred_region
      _
    $region9: #{tpu_custom_call.1} parent=1 // pred_fallthru
      _
    // Predicated region
    $region10: #{tpu_custom_call.1} parent=1 // pred_check
      _
    $region11: #{tpu_custom_call.1} parent=1 // pred_check_branch
      %21 = sbr.rel (0) target = $region13
    $region12: #{tpu_custom_call.1} parent=1 // pred_region
      _
    $region13: #{tpu_custom_call.1} parent=1 // pred_fallthru
      _
    // Predicated region
    $region14: #{tpu_custom_call.1} parent=1 // pred_check
      _
    $region15: #{tpu_custom_call.1} parent=1 // pred_check_branch
      %23 = sbr.rel (0) target = $region17
    $region16: #{tpu_custom_call.1} parent=1 // pred_region
      %s25 = ssub.s32 128, 128
      %26 = vsyncadd [#allocation3], %s25
      %s28 = sshll.u32 [#allocation2], 4
      %s29 = int_to_ptr.vmem [resolvable:$true] %s28
      %31 = dma.hbm_to_vmem [thread:$0]  %s3, 128, %s29, [#allocation3]
    $region17: #{tpu_custom_call.1} parent=1 // pred_fallthru
      _
    // Predicated region
    $region18: #{tpu_custom_call.1} parent=1 // pred_check
      _
    $region19: #{tpu_custom_call.1} parent=1 // pred_check_branch
      %33 = sbr.rel (0) target = $region21
    $region20: #{tpu_custom_call.1} parent=1 // pred_region
      _
    $region21: #{tpu_custom_call.1} parent=1 // pred_fallthru
      _
    // Predicated region
    $region22: #{tpu_custom_call.1} parent=1 // pred_check
      _
    $region23: #{tpu_custom_call.1} parent=1 // pred_check_branch
      %35 = sbr.rel (0) target = $region25
    $region24: #{tpu_custom_call.1} parent=1 // pred_region
      _
    $region25: #{tpu_custom_call.1} parent=1 // pred_fallthru
      _
    // Predicated region
    $region26: #{tpu_custom_call.1} parent=1 // pred_check
      _
    $region27: #{tpu_custom_call.1} parent=1 // pred_check_branch
      %37 = sbr.rel (0) target = $region29
    $region28: #{tpu_custom_call.1} parent=1 // pred_region
      _
    $region29: #{tpu_custom_call.1} parent=1 // pred_fallthru
      _
    // Predicated region
    $region30: #{tpu_custom_call.1} parent=1 // pred_check
      _
    $region31: #{tpu_custom_call.1} parent=1 // pred_check_branch
      %39 = sbr.rel (0) target = $region33
    $region32: #{tpu_custom_call.1} parent=1 // pred_region
      _
    $region33: #{tpu_custom_call.1} parent=1 // pred_fallthru
      _
    // Predicated region
    $region34: #{tpu_custom_call.1} parent=1 // pred_check
      _
    $region35: #{tpu_custom_call.1} parent=1 // pred_check_branch
      %41 = sbr.rel (0) target = $region37
    $region36: #{tpu_custom_call.1} parent=1 // pred_region
      _
    $region37: #{tpu_custom_call.1} parent=1 // pred_fallthru
      _
    // Predicated region
    $region38: #{tpu_custom_call.1} parent=1 // pred_check
      _
    $region39: #{tpu_custom_call.1} parent=1 // pred_check_branch
      %43 = sbr.rel (0) target = $region41
    $region40: #{tpu_custom_call.1} parent=1 // pred_region
      %44 = dma.done [#allocation3], 128
    $region41: #{tpu_custom_call.1} parent=1 // pred_fallthru
      _
    %v45 = vld [vmem:[%s0] sm:$0x3]
    %v46 = vld [vmem:[%s2] sm:$0xff]
    %v47 = vld [vmem:[%s2 + $0x8] sm:$0xff]
    %v48 = vld [vmem:[%s1] sm:$0x3]
    %v49 = vld [vmem:[#allocation2] sm:$0xff]
    %vm50 = vcmask 64512
    %v52 = vsel %vm50, %v48, 0
    %54 = vmatprep.subr.mxu0 0.0
    %55 = vmatpush1.msra.mxu0 %v49
    %56 = vmatprep.subr.mxu0 0.0
    %57 = vmatpush1.msra.mxu0 0.0
    %58 = vmatprep.subr.mxu0 0.0
    %59 = vmatpush1.msra.mxu0 0.0
    %60 = vmatprep.subr.mxu0 0.0
    %61 = vmatpush1.msra.mxu0 0.0
    %62 = vmatprep.subr.mxu0 0.0
    %63 = vmatpush1.msra.mxu0 0.0
    %64 = vmatprep.subr.mxu0 0.0
    %65 = vmatpush1.msra.mxu0 0.0
    %66 = vmatprep.subr.mxu0 0.0
    %67 = vmatpush1.msra.mxu0 0.0
    %68 = vmatprep.subr.mxu0 0.0
    %69 = vmatpush1.msra.mxu0 0.0
    %70 = vmatprep.subr.mxu0 0.0
    %71 = vmatpush1.msra.mxu0 0.0
    %72 = vmatprep.subr.mxu0 0.0
    %73 = vmatpush1.msra.mxu0 0.0
    %74 = vmatprep.subr.mxu0 0.0
    %75 = vmatpush1.msra.mxu0 0.0
    %76 = vmatprep.subr.mxu0 0.0
    %77 = vmatpush1.msra.mxu0 0.0
    %78 = vmatprep.subr.mxu0 0.0
    %79 = vmatpush1.msra.mxu0 0.0
    %80 = vmatprep.subr.mxu0 0.0
    %81 = vmatpush1.msra.mxu0 0.0
    %82 = vmatprep.subr.mxu0 0.0
    %83 = vmatpush1.msra.mxu0 0.0
    %84 = vmatprep.subr.mxu0 0.0
    %85 = vmatpush1.msra.mxu0 0.0
    %86 = vmatprep.subr.mxu0 0.0
    %87 = vmatpush1.msra.mxu0 0.0
    %88 = vmatprep.subr.mxu0 0.0
    %89 = vmatpush1.msra.mxu0 0.0
    %90 = vmatprep.subr.mxu0 0.0
    %91 = vmatpush1.msra.mxu0 0.0
    %92 = vmatprep.subr.mxu0 0.0
    %93 = vmatpush1.msra.mxu0 0.0
    %94 = vmatprep.subr.mxu0 0.0
    %95 = vmatpush1.msra.mxu0 0.0
    %96 = vmatprep.subr.mxu0 0.0
    %97 = vmatpush1.msra.mxu0 0.0
    %98 = vmatprep.subr.mxu0 0.0
    %99 = vmatpush1.msra.mxu0 0.0
    %100 = vmatprep.subr.mxu0 0.0
    %101 = vmatpush1.msra.mxu0 0.0
    %102 = vmatprep.subr.mxu0 0.0
    %103 = vmatpush1.msra.mxu0 0.0
    %104 = vmatprep.subr.mxu0 0.0
    %105 = vmatpush1.msra.mxu0 0.0
    %106 = vmatprep.subr.mxu0 0.0
    %107 = vmatpush1.msra.mxu0 0.0
    %108 = vmatprep.subr.mxu0 0.0
    %109 = vmatpush1.msra.mxu0 0.0
    %110 = vmatprep.subr.mxu0 0.0
    %111 = vmatpush1.msra.mxu0 0.0
    %112 = vmatprep.subr.mxu0 0.0
    %113 = vmatpush1.msra.mxu0 0.0
    %114 = vmatprep.subr.mxu0 0.0
    %115 = vmatpush1.msra.mxu0 0.0
    %116 = vmatprep.subr.mxu0 0.0
    %117 = vmatpush1.msra.mxu0 0.0
    %118 = vmatprep.mubr.f32.mxu0 0.0
    %119 = vmatmul.mubr.f32.gmra.mrb[0].mxu0 %v52
    %v120 = vpop.f32.mrb[0].mxu0
    %v121 = vadd.f32 0.0, %v120
    %v122 = vpop.f32.mrb[0].mxu0
    %123 = vdwg.mxu0
    %vm124 = vcmask 130048
    %v126 = vsel %vm124, %v45, 0
    %128 = vmatprep.subr.mxu0 0.0
    %129 = vmatpush1.msra.mxu0 %v46
    %130 = vmatprep.subr.mxu0 0.0
    %131 = vmatpush1.msra.mxu0 %v47
    %132 = vmatprep.subr.mxu0 0.0
    %133 = vmatpush1.msra.mxu0 0.0
    %134 = vmatprep.subr.mxu0 0.0
    %135 = vmatpush1.msra.mxu0 0.0
    %136 = vmatprep.subr.mxu0 0.0
    %137 = vmatpush1.msra.mxu0 0.0
    %138 = vmatprep.subr.mxu0 0.0
    %139 = vmatpush1.msra.mxu0 0.0
    %140 = vmatprep.subr.mxu0 0.0
    %141 = vmatpush1.msra.mxu0 0.0
    %142 = vmatprep.subr.mxu0 0.0
    %143 = vmatpush1.msra.mxu0 0.0
    %144 = vmatprep.subr.mxu0 0.0
    %145 = vmatpush1.msra.mxu0 0.0
    %146 = vmatprep.subr.mxu0 0.0
    %147 = vmatpush1.msra.mxu0 0.0
    %148 = vmatprep.subr.mxu0 0.0
    %149 = vmatpush1.msra.mxu0 0.0
    %150 = vmatprep.subr.mxu0 0.0
    %151 = vmatpush1.msra.mxu0 0.0
    %152 = vmatprep.subr.mxu0 0.0
    %153 = vmatpush1.msra.mxu0 0.0
    %154 = vmatprep.subr.mxu0 0.0
    %155 = vmatpush1.msra.mxu0 0.0
    %156 = vmatprep.subr.mxu0 0.0
    %157 = vmatpush1.msra.mxu0 0.0
    %158 = vmatprep.subr.mxu0 0.0
    %159 = vmatpush1.msra.mxu0 0.0
    %160 = vmatprep.subr.mxu0 0.0
    %161 = vmatpush1.msra.mxu0 0.0
    %162 = vmatprep.subr.mxu0 0.0
    %163 = vmatpush1.msra.mxu0 0.0
    %164 = vmatprep.subr.mxu0 0.0
    %165 = vmatpush1.msra.mxu0 0.0
    %166 = vmatprep.subr.mxu0 0.0
    %167 = vmatpush1.msra.mxu0 0.0
    %168 = vmatprep.subr.mxu0 0.0
    %169 = vmatpush1.msra.mxu0 0.0
    %170 = vmatprep.subr.mxu0 0.0
    %171 = vmatpush1.msra.mxu0 0.0
    %172 = vmatprep.subr.mxu0 0.0
    %173 = vmatpush1.msra.mxu0 0.0
    %174 = vmatprep.subr.mxu0 0.0
    %175 = vmatpush1.msra.mxu0 0.0
    %176 = vmatprep.subr.mxu0 0.0
    %177 = vmatpush1.msra.mxu0 0.0
    %178 = vmatprep.subr.mxu0 0.0
    %179 = vmatpush1.msra.mxu0 0.0
    %180 = vmatprep.subr.mxu0 0.0
    %181 = vmatpush1.msra.mxu0 0.0
    %182 = vmatprep.subr.mxu0 0.0
    %183 = vmatpush1.msra.mxu0 0.0
    %184 = vmatprep.subr.mxu0 0.0
    %185 = vmatpush1.msra.mxu0 0.0
    %186 = vmatprep.subr.mxu0 0.0
    %187 = vmatpush1.msra.mxu0 0.0
    %188 = vmatprep.subr.mxu0 0.0
    %189 = vmatpush1.msra.mxu0 0.0
    %190 = vmatprep.subr.mxu0 0.0
    %191 = vmatpush1.msra.mxu0 0.0
    %192 = vmatprep.mubr.f32.mxu0 0.0
    %193 = vmatmul.mubr.f32.gmra.mrb[0].mxu0 %v126
    %v194 = vpop.f32.mrb[0].mxu0
    %v195 = vadd.f32 %v121, %v194
    %v196 = vpop.f32.mrb[0].mxu0
    %197 = vdwg.mxu0
    %v198 = vld [vmem:[%s4] sm:$0x1]
    %v200 = vlaneseq
    %v201 = vshrl.u32 %v200, 7
    %v202 = vsub.s32 0, %v201
    %v203 = vrot.slane %v198, %v202
    %v205 = vadd.f32 %v195, %v203
    %v206 = vmax.f32 %v205, 0.0
    %v207 = vld [vmem:[%s5] sm:$0xff]
    %v208 = vld [vmem:[%s5 + $0x8] sm:$0xff]
    %v209 = vld [vmem:[%s5 + $0x10] sm:$0xff]
    %v210 = vld [vmem:[%s5 + $0x18] sm:$0xff]
    %v211 = vld [vmem:[%s6] sm:$0x1]
    %v213 = vlaneseq
    %v214 = vshrl.u32 %v213, 7
    %v215 = vsub.s32 0, %v214
    %v216 = vrot.slane %v211, %v215
    %vm218 = vcmask 261120
    %v220 = vsel %vm218, %v206, 0
    %222 = vmatprep.subr.mxu0 0.0
    %223 = vmatpush1.msra.mxu0 %v207
    %224 = vmatprep.subr.mxu0 0.0
    %225 = vmatpush1.msra.mxu0 %v208
    %226 = vmatprep.subr.mxu0 0.0
    %227 = vmatpush1.msra.mxu0 %v209
    %228 = vmatprep.subr.mxu0 0.0
    %229 = vmatpush1.msra.mxu0 %v210
    %230 = vmatprep.subr.mxu0 0.0
    %231 = vmatpush1.msra.mxu0 0.0
    %232 = vmatprep.subr.mxu0 0.0
    %233 = vmatpush1.msra.mxu0 0.0
    %234 = vmatprep.subr.mxu0 0.0
    %235 = vmatpush1.msra.mxu0 0.0
    %236 = vmatprep.subr.mxu0 0.0
    %237 = vmatpush1.msra.mxu0 0.0
    %238 = vmatprep.subr.mxu0 0.0
    %239 = vmatpush1.msra.mxu0 0.0
    %240 = vmatprep.subr.mxu0 0.0
    %241 = vmatpush1.msra.mxu0 0.0
    %242 = vmatprep.subr.mxu0 0.0
    %243 = vmatpush1.msra.mxu0 0.0
    %244 = vmatprep.subr.mxu0 0.0
    %245 = vmatpush1.msra.mxu0 0.0
    %246 = vmatprep.subr.mxu0 0.0
    %247 = vmatpush1.msra.mxu0 0.0
    %248 = vmatprep.subr.mxu0 0.0
    %249 = vmatpush1.msra.mxu0 0.0
    %250 = vmatprep.subr.mxu0 0.0
    %251 = vmatpush1.msra.mxu0 0.0
    %252 = vmatprep.subr.mxu0 0.0
    %253 = vmatpush1.msra.mxu0 0.0
    %254 = vmatprep.subr.mxu0 0.0
    %255 = vmatpush1.msra.mxu0 0.0
    %256 = vmatprep.subr.mxu0 0.0
    %257 = vmatpush1.msra.mxu0 0.0
    %258 = vmatprep.subr.mxu0 0.0
    %259 = vmatpush1.msra.mxu0 0.0
    %260 = vmatprep.subr.mxu0 0.0
    %261 = vmatpush1.msra.mxu0 0.0
    %262 = vmatprep.subr.mxu0 0.0
    %263 = vmatpush1.msra.mxu0 0.0
    %264 = vmatprep.subr.mxu0 0.0
    %265 = vmatpush1.msra.mxu0 0.0
    %266 = vmatprep.subr.mxu0 0.0
    %267 = vmatpush1.msra.mxu0 0.0
    %268 = vmatprep.subr.mxu0 0.0
    %269 = vmatpush1.msra.mxu0 0.0
    %270 = vmatprep.subr.mxu0 0.0
    %271 = vmatpush1.msra.mxu0 0.0
    %272 = vmatprep.subr.mxu0 0.0
    %273 = vmatpush1.msra.mxu0 0.0
    %274 = vmatprep.subr.mxu0 0.0
    %275 = vmatpush1.msra.mxu0 0.0
    %276 = vmatprep.subr.mxu0 0.0
    %277 = vmatpush1.msra.mxu0 0.0
    %278 = vmatprep.subr.mxu0 0.0
    %279 = vmatpush1.msra.mxu0 0.0
    %280 = vmatprep.subr.mxu0 0.0
    %281 = vmatpush1.msra.mxu0 0.0
    %282 = vmatprep.subr.mxu0 0.0
    %283 = vmatpush1.msra.mxu0 0.0
    %284 = vmatprep.subr.mxu0 0.0
    %285 = vmatpush1.msra.mxu0 0.0
    %286 = vmatprep.mubr.f32.mxu0 0.0
    %287 = vmatmul.mubr.f32.gmra.mrb[0].mxu0 %v220
    %v288 = vpop.f32.mrb[0].mxu0
    %v289 = vadd.f32 %v216, %v288
    %v290 = vpop.f32.mrb[0].mxu0
    %291 = vdwg.mxu0
    %v292 = vmax.f32 %v289, 0.0
    %v293 = vld [vmem:[%s7] sm:$0xff]
    %v294 = vld [vmem:[%s7 + $0x8] sm:$0xff]
    %v295 = vld [vmem:[%s7 + $0x10] sm:$0xff]
    %v296 = vld [vmem:[%s7 + $0x18] sm:$0xff]
    %v297 = vld [vmem:[%s8] sm:$0x1]
    %v299 = vlaneseq
    %v300 = vshrl.u32 %v299, 7
    %v301 = vsub.s32 0, %v300
    %v302 = vrot.slane %v297, %v301
    %v305 = vsel %vm218, %v292, 0
    %307 = vmatprep.subr.mxu0 0.0
    %308 = vmatpush1.msra.mxu0 %v293
    %309 = vmatprep.subr.mxu0 0.0
    %310 = vmatpush1.msra.mxu0 %v294
    %311 = vmatprep.subr.mxu0 0.0
    %312 = vmatpush1.msra.mxu0 %v295
    %313 = vmatprep.subr.mxu0 0.0
    %314 = vmatpush1.msra.mxu0 %v296
    %315 = vmatprep.subr.mxu0 0.0
    %316 = vmatpush1.msra.mxu0 0.0
    %317 = vmatprep.subr.mxu0 0.0
    %318 = vmatpush1.msra.mxu0 0.0
    %319 = vmatprep.subr.mxu0 0.0
    %320 = vmatpush1.msra.mxu0 0.0
    %321 = vmatprep.subr.mxu0 0.0
    %322 = vmatpush1.msra.mxu0 0.0
    %323 = vmatprep.subr.mxu0 0.0
    %324 = vmatpush1.msra.mxu0 0.0
    %325 = vmatprep.subr.mxu0 0.0
    %326 = vmatpush1.msra.mxu0 0.0
    %327 = vmatprep.subr.mxu0 0.0
    %328 = vmatpush1.msra.mxu0 0.0
    %329 = vmatprep.subr.mxu0 0.0
    %330 = vmatpush1.msra.mxu0 0.0
    %331 = vmatprep.subr.mxu0 0.0
    %332 = vmatpush1.msra.mxu0 0.0
    %333 = vmatprep.subr.mxu0 0.0
    %334 = vmatpush1.msra.mxu0 0.0
    %335 = vmatprep.subr.mxu0 0.0
    %336 = vmatpush1.msra.mxu0 0.0
    %337 = vmatprep.subr.mxu0 0.0
    %338 = vmatpush1.msra.mxu0 0.0
    %339 = vmatprep.subr.mxu0 0.0
    %340 = vmatpush1.msra.mxu0 0.0
    %341 = vmatprep.subr.mxu0 0.0
    %342 = vmatpush1.msra.mxu0 0.0
    %343 = vmatprep.subr.mxu0 0.0
    %344 = vmatpush1.msra.mxu0 0.0
    %345 = vmatprep.subr.mxu0 0.0
    %346 = vmatpush1.msra.mxu0 0.0
    %347 = vmatprep.subr.mxu0 0.0
    %348 = vmatpush1.msra.mxu0 0.0
    %349 = vmatprep.subr.mxu0 0.0
    %350 = vmatpush1.msra.mxu0 0.0
    %351 = vmatprep.subr.mxu0 0.0
    %352 = vmatpush1.msra.mxu0 0.0
    %353 = vmatprep.subr.mxu0 0.0
    %354 = vmatpush1.msra.mxu0 0.0
    %355 = vmatprep.subr.mxu0 0.0
    %356 = vmatpush1.msra.mxu0 0.0
    %357 = vmatprep.subr.mxu0 0.0
    %358 = vmatpush1.msra.mxu0 0.0
    %359 = vmatprep.subr.mxu0 0.0
    %360 = vmatpush1.msra.mxu0 0.0
    %361 = vmatprep.subr.mxu0 0.0
    %362 = vmatpush1.msra.mxu0 0.0
    %363 = vmatprep.subr.mxu0 0.0
    %364 = vmatpush1.msra.mxu0 0.0
    %365 = vmatprep.subr.mxu0 0.0
    %366 = vmatpush1.msra.mxu0 0.0
    %367 = vmatprep.subr.mxu0 0.0
    %368 = vmatpush1.msra.mxu0 0.0
    %369 = vmatprep.subr.mxu0 0.0
    %370 = vmatpush1.msra.mxu0 0.0
    %371 = vmatprep.mubr.f32.mxu0 0.0
    %372 = vmatmul.mubr.f32.gmra.mrb[0].mxu0 %v305
    %v373 = vpop.f32.mrb[0].mxu0
    %v374 = vadd.f32 %v302, %v373
    %v375 = vpop.f32.mrb[0].mxu0
    %376 = vdwg.mxu0
    %v377 = vtanh.pop %v374
    %v378 = vmax.f32 %v374, -5.0
    %v379 = vmin.f32 %v378, 2.0
    %v380 = vmul.f32 %v379, 1.442695
    %v381 = vpow.pop %v380
    %v382 = vlaneseq
    %v383 = vand.u32 %v382, 127
    %vm384 = vcmp.lt.s32.totalorder %v383, 4
    %v385 = vsel %vm384, %v377, %v381
    %vm386 = vcmask 58368
    %387 = vst.msk [vmem:[#allocation5] sm:$0x3] %vm386, %v385
    // Predicated region
    $region42: #{tpu_custom_call.1} parent=1 // pred_check
      _
    $region43: #{tpu_custom_call.1} parent=1 // pred_check_branch
      %389 = sbr.rel (0) target = $region45
    $region44: #{tpu_custom_call.1} parent=1 // pred_region
      %s391 = ssub.s32 32, 32
      %392 = vsyncadd [#allocation4], %s391
      %s394 = sshll.u32 [#allocation5], 4
      %s395 = int_to_ptr.vmem [resolvable:$true] %s394
      %397 = dma.vmem_to_hbm [thread:$0]  %s395, 32, %s9, [#allocation4]
    $region45: #{tpu_custom_call.1} parent=1 // pred_fallthru
      _
    // Predicated region
    $region46: #{tpu_custom_call.1} parent=1 // pred_check
      _
    $region47: #{tpu_custom_call.1} parent=1 // pred_check_branch
      %399 = sbr.rel (0) target = $region49
    $region48: #{tpu_custom_call.1} parent=1 // pred_region
      %400 = dma.done [#allocation4], 32
    $region49: #{tpu_custom_call.1} parent=1 // pred_fallthru
      _
    %401 = vsyncpa [#allocation3], 1
    %402 = vsyncpa [#allocation4], 1

</llo_original>
